<compile_context>
chip_gen: v7x
topology: tpu7x:2x2x1
jax: 0.10.0
libtpu: 0.0.40
codegen_flags: <defaults>
</compile_context>

<pallas_src>
import functools
import math

import jax
import jax.numpy as jnp
from jax import lax
from jax.experimental import pallas as pl
from jax.experimental.pallas import tpu as pltpu

# MXU operand dtype (accumulation stays f32). bf16 is native on v5e/v6e/v7x.
_MXU_DTYPE = jnp.bfloat16


def lambda_init_fn(depth):
    return 0.8 - 0.6 * math.exp(-0.3 * depth)


@functools.lru_cache(maxsize=None)
def _vmem_limit_bytes():
    """Scoped-VMEM limit: ~half of physical VMEM (64 MiB on v5e/v6e, 32 MiB on v7x)."""
    try:
        cap = int(pltpu.get_tpu_info().vmem_capacity_bytes)
    except Exception:
        cap = 64 * 1024 * 1024  # conservative fallback (safe on every generation)
    return int(min(100 * 1024 * 1024, max(32 * 1024 * 1024, cap // 2)))


def _divisor_tiles(dim, candidates):
    c = [t for t in candidates if t <= dim and dim % t == 0]
    return c if c else [dim]


def _pick_tile(dim, candidates):
    return _divisor_tiles(dim, candidates)[0]


# ----------------------------------------------------------------------------
# Tiled linear (projection) kernels
# ----------------------------------------------------------------------------
def _matmul_bias_kernel(x_ref, w_ref, b_ref, o_ref, acc_ref):
    k = pl.program_id(2)

    @pl.when(k == 0)
    def _():
        acc_ref[...] = jnp.zeros_like(acc_ref)

    acc_ref[...] += jnp.dot(x_ref[...].astype(_MXU_DTYPE),
                            w_ref[...].astype(_MXU_DTYPE),
                            preferred_element_type=jnp.float32)

    @pl.when(k == pl.num_programs(2) - 1)
    def _():
        o_ref[...] = (acc_ref[...] + b_ref[...]).astype(o_ref.dtype)


def _matmul_kernel(x_ref, w_ref, o_ref, acc_ref):
    k = pl.program_id(2)

    @pl.when(k == 0)
    def _():
        acc_ref[...] = jnp.zeros_like(acc_ref)

    acc_ref[...] += jnp.dot(x_ref[...].astype(_MXU_DTYPE),
                            w_ref[...].astype(_MXU_DTYPE),
                            preferred_element_type=jnp.float32)

    @pl.when(k == pl.num_programs(2) - 1)
    def _():
        o_ref[...] = acc_ref[...].astype(o_ref.dtype)


def pallas_linear(x, w_t, b=None):
    """x:(M,K) @ w_t:(K,N) [+ b:(N,)], tiled over (M, N, K) with f32 acc."""
    M, K = x.shape
    N = w_t.shape[1]
    tm = _pick_tile(M, (512, 256, 128, 64, 32, 16, 8))
    tn = _pick_tile(N, (512, 256, 128))
    tk = _pick_tile(K, (512, 256, 128))
    grid = (M // tm, N // tn, K // tk)

    x_spec = pl.BlockSpec((tm, tk), lambda i, j, k: (i, k))
    w_spec = pl.BlockSpec((tk, tn), lambda i, j, k: (k, j))
    o_spec = pl.BlockSpec((tm, tn), lambda i, j, k: (i, j))
    cparams = pltpu.CompilerParams(
        dimension_semantics=("parallel", "parallel", "arbitrary"),
        vmem_limit_bytes=_vmem_limit_bytes())
    scratch = [pltpu.VMEM((tm, tn), jnp.float32)]
    out_shape = jax.ShapeDtypeStruct((M, N), x.dtype)

    if b is None:
        return pl.pallas_call(
            _matmul_kernel,
            out_shape=out_shape,
            grid=grid,
            in_specs=[x_spec, w_spec],
            out_specs=o_spec,
            scratch_shapes=scratch,
            compiler_params=cparams,
        )(x, w_t)

    b_spec = pl.BlockSpec((1, tn), lambda i, j, k: (0, j))
    return pl.pallas_call(
        _matmul_bias_kernel,
        out_shape=out_shape,
        grid=grid,
        in_specs=[x_spec, w_spec, b_spec],
        out_specs=o_spec,
        scratch_shapes=scratch,
        compiler_params=cparams,
    )(x, w_t, b.reshape(1, N))


# ----------------------------------------------------------------------------
# Differential attention kernel (per batch, T- and S-tiled, online softmax)
# ----------------------------------------------------------------------------
def _diff_attn_kernel(lam_ref, gamma_ref, q_ref, k_ref, v_ref, o_ref,
                      acc1_sc, acc2_sc, ml_sc, *, num_heads, d2):
    # lam_ref  : SMEM (1,)         -> lambda_full
    # gamma_ref: VMEM (1, d2)      -> subln weight * (1 - lambda_init)
    # q_ref    : (1, tT, 2E)       resident across the S axis
    # k_ref    : (1, tS, 2E)
    # v_ref    : (1, tS, E)
    # o_ref    : (1, tT, E)        lane-dense output, resident across S axis
    # acc1_sc  : (tT, E)  f32      per-head columns h*d2 .. (h+1)*d2
    # acc2_sc  : (tT, E)  f32
    # ml_sc    : (tT, 4H) f32      lanes 4h+0..3 = (m1, l1, m2, l2) of head h
    s_idx = pl.program_id(2)
    n_s = pl.num_programs(2)

    @pl.when(s_idx == 0)
    def _():
        acc1_sc[...] = jnp.zeros_like(acc1_sc)
        acc2_sc[...] = jnp.zeros_like(acc2_sc)
        lane = lax.broadcasted_iota(jnp.int32, ml_sc.shape, 1)
        # even lanes (m1, m2) -> very negative running max; odd lanes (l1, l2) -> 0
        ml_sc[...] = jnp.where(lane % 2 == 0, -1e30, 0.0).astype(jnp.float32)

    # Contract last dims of both operands: no k.T / XLU transpose.
    dimnums = (((1,), (1,)), ((), ()))

    for h in range(num_heads):
        cq = 2 * h * d2
        cv = h * d2

        # Per-head ref slices: load only the columns this head needs.
        q1 = q_ref[0, :, cq:cq + d2].astype(_MXU_DTYPE)            # (tT, d2)
        q2 = q_ref[0, :, cq + d2:cq + 2 * d2].astype(_MXU_DTYPE)
        k1 = k_ref[0, :, cq:cq + d2].astype(_MXU_DTYPE)            # (tS, d2)
        k2 = k_ref[0, :, cq + d2:cq + 2 * d2].astype(_MXU_DTYPE)
        vv = v_ref[0, :, cv:cv + d2].astype(_MXU_DTYPE)            # (tS, d2)

        s1 = lax.dot_general(q1, k1, dimnums,
                             preferred_element_type=jnp.float32)   # (tT, tS)
        s2 = lax.dot_general(q2, k2, dimnums,
                             preferred_element_type=jnp.float32)   # (tT, tS)

        m1_old = ml_sc[:, 4 * h + 0:4 * h + 1]
        l1_old = ml_sc[:, 4 * h + 1:4 * h + 2]
        m2_old = ml_sc[:, 4 * h + 2:4 * h + 3]
        l2_old = ml_sc[:, 4 * h + 3:4 * h + 4]

        m1_new = jnp.maximum(m1_old, jnp.max(s1, axis=-1, keepdims=True))
        m2_new = jnp.maximum(m2_old, jnp.max(s2, axis=-1, keepdims=True))
        a1 = jnp.exp(m1_old - m1_new)
        a2 = jnp.exp(m2_old - m2_new)
        p1 = jnp.exp(s1 - m1_new)
        p2 = jnp.exp(s2 - m2_new)

        ml_sc[:, 4 * h + 0:4 * h + 1] = m1_new
        ml_sc[:, 4 * h + 1:4 * h + 2] = a1 * l1_old + jnp.sum(p1, axis=-1, keepdims=True)
        ml_sc[:, 4 * h + 2:4 * h + 3] = m2_new
        ml_sc[:, 4 * h + 3:4 * h + 4] = a2 * l2_old + jnp.sum(p2, axis=-1, keepdims=True)

        t_rows = p1.shape[0]
        if d2 < 128 and t_rows % 8 == 0:
            # Both branches share vv: stack along the sublane axis so the P@V
            # stage is one MXU pass instead of two (halves issue/drain count
            # when the N dim uses < full MXU width).
            p = jnp.concatenate([p1, p2], axis=0).astype(_MXU_DTYPE)     # (2*tT, tS)
            pv = jnp.dot(p, vv, preferred_element_type=jnp.float32)      # (2*tT, d2)
            pv1 = pv[:t_rows]
            pv2 = pv[t_rows:]
        else:
            pv1 = jnp.dot(p1.astype(_MXU_DTYPE), vv,
                          preferred_element_type=jnp.float32)
            pv2 = jnp.dot(p2.astype(_MXU_DTYPE), vv,
                          preferred_element_type=jnp.float32)

        acc1_sc[:, cv:cv + d2] = a1 * acc1_sc[:, cv:cv + d2] + pv1
        acc2_sc[:, cv:cv + d2] = a2 * acc2_sc[:, cv:cv + d2] + pv2

    @pl.when(s_idx == n_s - 1)
    def _():
        lam_full = lam_ref[0]
        gamma = gamma_ref[...]                 # (1, d2), includes (1 - lambda_init)
        outs = []
        for h in range(num_heads):
            cv = h * d2
            l1 = ml_sc[:, 4 * h + 1:4 * h + 2]
            l2 = ml_sc[:, 4 * h + 3:4 * h + 4]
            # Exact division: runs once per tile, avoids approx-reciprocal error
            # being amplified by the branch subtraction and the rsqrt.
            attn1 = acc1_sc[:, cv:cv + d2] / l1
            attn2 = acc2_sc[:, cv:cv + d2] / l2
            attn = attn1 - lam_full * attn2    # (tT, d2)
            # RMSNorm over the last dim (eps = 1e-5); affine weight and
            # (1 - lambda_init) already folded into gamma.
            ms = jnp.mean(attn * attn, axis=-1, keepdims=True)
            outs.append(attn * lax.rsqrt(ms + 1e-5) * gamma)
        # Single lane-dense (tT, E) store — no per-head masked column stores.
        o_ref[0] = jnp.concatenate(outs, axis=-1).astype(o_ref.dtype)


def _attn_tiles(T, S, E):
    """Pick (tT, tS).

    tT is capped at 128 and tS at 256 so every (tT, tS) f32 score tile is
    <= 32 KiB (~8 vregs); s1/s2/p1/p2 together stay far under the 256 KiB
    vreg file.  Within that, pick the largest tiles that fit the per-chip
    scoped-VMEM budget (double-buffered blocks + scratch).
    """
    budget = int(_vmem_limit_bytes() * 0.6)
    f32 = 4

    def vmem_est(tT, tS):
        io = 2 * f32 * (tT * 2 * E      # q (double-buffered)
                        + tS * 2 * E    # k
                        + tS * E        # v
                        + tT * E)       # o
        scr = f32 * (2 * tT * max(E, 128) + tT * 128)   # acc1/acc2 + packed m/l
        return io + scr

    tT_c = _divisor_tiles(T, (128, 64, 32, 16, 8))
    tS_c = _divisor_tiles(S, (256, 128, 64, 32, 16, 8))
    for tT in tT_c:
        for tS in tS_c:
            if vmem_est(tT, tS) <= budget:
                return tT, tS
    return tT_c[-1], tS_c[-1]


def pallas_diff_attention(qp, kp, vp, lam_full, gamma_scaled, *, num_heads):
    """qp:(B,T,2E) kp:(B,S,2E) vp:(B,S,E) lam:(1,) gamma:(1,d2) -> (B,T,E)."""
    B, T, E2 = qp.shape
    S = kp.shape[1]
    E = vp.shape[2]
    d2 = E // num_heads                         # 2 * head_dim
    tT, tS = _attn_tiles(T, S, E)
    grid = (B, T // tT, S // tS)

    kernel = functools.partial(_diff_attn_kernel, num_heads=num_heads, d2=d2)

    return pl.pallas_call(
        kernel,
        out_shape=jax.ShapeDtypeStruct((B, T, E), jnp.float32),
        grid=grid,
        in_specs=[
            pl.BlockSpec(memory_space=pltpu.MemorySpace.SMEM),      # lambda_full
            pl.BlockSpec((1, d2), lambda b, t, s: (0, 0)),          # gamma
            pl.BlockSpec((1, tT, E2), lambda b, t, s: (b, t, 0)),   # q tile (resident over s)
            pl.BlockSpec((1, tS, E2), lambda b, t, s: (b, s, 0)),   # k tile
            pl.BlockSpec((1, tS, E), lambda b, t, s: (b, s, 0)),    # v tile
        ],
        out_specs=pl.BlockSpec((1, tT, E), lambda b, t, s: (b, t, 0)),  # lane-dense
        scratch_shapes=[
            pltpu.VMEM((tT, E), jnp.float32),               # acc1 (lane-dense, per-head cols)
            pltpu.VMEM((tT, E), jnp.float32),               # acc2
            pltpu.VMEM((tT, 4 * num_heads), jnp.float32),   # packed m1/l1/m2/l2
        ],
        compiler_params=pltpu.CompilerParams(
            dimension_semantics=("parallel", "parallel", "arbitrary"),
            vmem_limit_bytes=_vmem_limit_bytes()),
    )(lam_full, gamma_scaled, qp, kp, vp)


# ----------------------------------------------------------------------------
# Module wrapper
# ----------------------------------------------------------------------------
def init_params(key, embedding_dim, num_heads, depth=0.5):
    head_dim = embedding_dim // num_heads // 2
    ks = jax.random.split(key, 10)
    p = {
        "wq": jax.random.normal(ks[0], (2 * embedding_dim, embedding_dim)) * 0.05,
        "bq": jax.random.normal(ks[1], (2 * embedding_dim,)) * 0.05,
        "wk": jax.random.normal(ks[2], (2 * embedding_dim, embedding_dim)) * 0.05,
        "bk": jax.random.normal(ks[3], (2 * embedding_dim,)) * 0.05,
        "wv": jax.random.normal(ks[4], (embedding_dim, embedding_dim)) * 0.05,
        "bv": jax.random.normal(ks[5], (embedding_dim,)) * 0.05,
        "wo": jax.random.normal(ks[6], (embedding_dim, embedding_dim)) * 0.05,
        "lambda_q1": jax.random.normal(ks[7], (head_dim,)) * 0.1,
        "lambda_k1": jax.random.normal(ks[8], (head_dim,)) * 0.1,
        "lambda_q2": jax.random.normal(ks[9], (head_dim,)) * 0.1,
        "lambda_k2": jax.random.normal(jax.random.fold_in(key, 42), (head_dim,)) * 0.1,
        "subln_weight": jnp.ones((2 * head_dim,), jnp.float32),
        "lambda_init": jnp.float32(lambda_init_fn(depth)),
    }
    return jax.tree.map(lambda x: jnp.asarray(x, jnp.float32), p)


def multihead_diff1_forward(params, q, k, v, *, embedding_dim, num_heads):
    B, T, E = q.shape
    S = v.shape[1]
    H = num_heads
    D2 = E // H                                  # 2 * head_dim

    wq_t, wk_t, wv_t = params["wq"].T, params["wk"].T, params["wv"].T

    # Fused projections: read the activation from HBM once when inputs alias.
    if (q is k) and (k is v):
        w_t = jnp.concatenate([wq_t, wk_t, wv_t], axis=1)        # (E, 5E)
        b = jnp.concatenate([params["bq"], params["bk"], params["bv"]])
        fused = pallas_linear(q.reshape(B * T, E), w_t, b)
        qp = fused[:, :2 * E].reshape(B, T, 2 * E)
        kp = fused[:, 2 * E:4 * E].reshape(B, S, 2 * E)
        vp = fused[:, 4 * E:].reshape(B, S, E)
    elif k is v:
        qp = pallas_linear(q.reshape(B * T, E), wq_t, params["bq"]).reshape(B, T, 2 * E)
        w_t = jnp.concatenate([wk_t, wv_t], axis=1)              # (E, 3E)
        b = jnp.concatenate([params["bk"], params["bv"]])
        fused = pallas_linear(k.reshape(B * S, E), w_t, b)
        kp = fused[:, :2 * E].reshape(B, S, 2 * E)
        vp = fused[:, 2 * E:].reshape(B, S, E)
    else:
        qp = pallas_linear(q.reshape(B * T, E), wq_t, params["bq"]).reshape(B, T, 2 * E)
        kp = pallas_linear(k.reshape(B * S, E), wk_t, params["bk"]).reshape(B, S, 2 * E)
        vp = pallas_linear(v.reshape(B * S, E), wv_t, params["bv"]).reshape(B, S, E)

    # Scalars.
    lambda_1 = jnp.exp(jnp.sum(params["lambda_q1"] * params["lambda_k1"]))
    lambda_2 = jnp.exp(jnp.sum(params["lambda_q2"] * params["lambda_k2"]))
    lambda_full = lambda_1 - lambda_2 + params["lambda_init"]
    lam = lambda_full.reshape(1).astype(jnp.float32)

    # Fold (1 - lambda_init) into the RMSNorm affine weight.
    gamma_scaled = (params["subln_weight"] *
                    (1.0 - params["lambda_init"])).reshape(1, D2).astype(jnp.float32)

    # Differential attention: heads selected inside the kernel; output comes
    # back already merged as (B, T, H*D2) = (B, T, E) — no HBM transposes.
    attn = pallas_diff_attention(qp, kp, vp, lam, gamma_scaled, num_heads=H)

    # out_proj (no bias -> no-bias matmul variant).
    out = pallas_linear(attn.reshape(B * T, E), params["wo"].T, None).reshape(B, T, E)
    return out


# Pure-JAX f32 reference for validation (mirrors the PyTorch forward).
def _reference_forward(params, q, k, v, *, embedding_dim, num_heads):
    B, T, E = q.shape
    S = v.shape[1]
    H = num_heads
    head_dim = E // H // 2
    D2 = 2 * head_dim

    qp = q @ params["wq"].T + params["bq"]
    kp = k @ params["wk"].T + params["bk"]
    vp = v @ params["wv"].T + params["bv"]

    qh = qp.reshape(B, T, 2 * H, D2).transpose(0, 2, 1, 3).reshape(B, H, 2, T, D2)
    kh = kp.reshape(B, S, 2 * H, D2).transpose(0, 2, 1, 3).reshape(B, H, 2, S, D2)
    vh = vp.reshape(B, S, H, D2).transpose(0, 2, 1, 3)

    q1, q2 = qh[:, :, 0], qh[:, :, 1]
    k1, k2 = kh[:, :, 0], kh[:, :, 1]

    a1 = jax.nn.softmax(jnp.einsum("bhtd,bhsd->bhts", q1, k1), axis=-1)
    a2 = jax.nn.softmax(jnp.einsum("bhtd,bhsd->bhts", q2, k2), axis=-1)

    lambda_1 = jnp.exp(jnp.sum(params["lambda_q1"] * params["lambda_k1"]))
    lambda_2 = jnp.exp(jnp.sum(params["lambda_q2"] * params["lambda_k2"]))
    lambda_full = lambda_1 - lambda_2 + params["lambda_init"]

    aw = a1 - lambda_full * a2
    attn = jnp.einsum("bhts,bhsd->bhtd", aw, vh)
    ms = jnp.mean(attn * attn, axis=-1, keepdims=True)
    attn = attn * jax.lax.rsqrt(ms + 1e-5) * params["subln_weight"]
    attn = attn * (1.0 - params["lambda_init"])
    attn = attn.transpose(0, 2, 1, 3).reshape(B, T, E)
    return attn @ params["wo"].T


if __name__ == "__main__":
    embedding_dim = 32
    num_heads = 2       # head_dim = 8, 2*head_dim = 16
    B, T, S = 2, 8, 8

    key = jax.random.PRNGKey(0)
    kq, kk, kv, kp = jax.random.split(key, 4)
    q = jax.random.normal(kq, (B, T, embedding_dim), jnp.float32)
    k = jax.random.normal(kk, (B, S, embedding_dim), jnp.float32)
    v = jax.random.normal(kv, (B, S, embedding_dim), jnp.float32)

    params = init_params(kp, embedding_dim, num_heads, depth=0.5)

    # Tolerance accounts for bf16 MXU operands (f32 accumulation) in the
    # projections and both attention matmuls; the f32 reference below uses
    # full-precision matmuls.
    ATOL = RTOL = 2e-2

    # --- cross-attention path (distinct q / k / v, un-fused projections) ---
    out = multihead_diff1_forward(params, q, k, v,
                                  embedding_dim=embedding_dim,
                                  num_heads=num_heads)
    out = jax.block_until_ready(out)
    ref = _reference_forward(params, q, k, v,
                             embedding_dim=embedding_dim,
                             num_heads=num_heads)
    ref = jax.block_until_ready(ref)
    assert out.shape == (B, T, embedding_dim)
    assert jnp.allclose(out, ref, atol=ATOL, rtol=RTOL), "cross-attn mismatch vs reference"

    # --- self-attention path (q is k is v -> fused QKV projection kernel) ---
    out_sa = multihead_diff1_forward(params, q, q, q,
                                     embedding_dim=embedding_dim,
                                     num_heads=num_heads)
    out_sa = jax.block_until_ready(out_sa)
    ref_sa = _reference_forward(params, q, q, q,
                                embedding_dim=embedding_dim,
                                num_heads=num_heads)
    ref_sa = jax.block_until_ready(ref_sa)
    assert jnp.allclose(out_sa, ref_sa, atol=ATOL, rtol=RTOL), "self-attn mismatch vs reference"

    print("KERNEL_OK")
</pallas_src>

<mosaic_0001>
module attributes {stable_mosaic.version = 11 : i64} {
  func.func @_matmul_bias_kernel(%arg0: i32, %arg1: i32, %arg2: i32, %arg3: memref<16x32xf32, #tpu.memory_space<vmem>>, %arg4: memref<32x64xf32, #tpu.memory_space<vmem>>, %arg5: memref<1x64xf32, #tpu.memory_space<vmem>>, %arg6: memref<16x64xf32, #tpu.memory_space<vmem>>, %arg7: memref<16x64xf32, #tpu.memory_space<vmem>>) attributes {dimension_semantics = [#tpu.dimension_semantics<parallel>, #tpu.dimension_semantics<parallel>, #tpu.dimension_semantics<arbitrary>], iteration_bounds = array<i64: 1, 1, 1>, scalar_prefetch = 0 : i64, scratch_operands = 1 : i64, tpu.core_type = #tpu.core_type<tc>, window_params = [{transform_indices = @transform_0, window_bounds = array<i64: 16, 32>}, {transform_indices = @transform_1, window_bounds = array<i64: 32, 64>}, {transform_indices = @transform_2, window_bounds = array<i64: 1, 64>}, {transform_indices = @transform_3, window_bounds = array<i64: 16, 64>}]} {
    %c0_i32 = arith.constant 0 : i32
    %0 = arith.cmpi eq, %arg2, %c0_i32 : i32
    %1 = arith.extui %0 : i1 to i32
    %c0_i32_0 = arith.constant 0 : i32
    %2 = arith.cmpi ne, %1, %c0_i32_0 : i32
    scf.if %2 {
      %cst_10 = arith.constant 0.000000e+00 : f32
      %14 = vector.broadcast %cst_10 : f32 to vector<16x64xf32>
      %c0_11 = arith.constant 0 : index
      %c0_12 = arith.constant 0 : index
      %15 = vector.load %arg7[%c0_11, %c0_12] : memref<16x64xf32, #tpu.memory_space<vmem>>, vector<16x64xf32>
      tpu.vector_store %arg7[%c0_11, %c0_12], %14 {strides = array<i32>} : memref<16x64xf32, #tpu.memory_space<vmem>>, vector<16x64xf32>,
    } else {
    }
    %c0 = arith.constant 0 : index
    %c0_1 = arith.constant 0 : index
    %3 = vector.load %arg7[%c0, %c0_1] : memref<16x64xf32, #tpu.memory_space<vmem>>, vector<16x64xf32>
    %c0_2 = arith.constant 0 : index
    %c0_3 = arith.constant 0 : index
    %4 = vector.load %arg3[%c0_2, %c0_3] : memref<16x32xf32, #tpu.memory_space<vmem>>, vector<16x32xf32>
    %5 = arith.truncf %4 : vector<16x32xf32> to vector<16x32xbf16>
    %c0_4 = arith.constant 0 : index
    %c0_5 = arith.constant 0 : index
    %6 = vector.load %arg4[%c0_4, %c0_5] : memref<32x64xf32, #tpu.memory_space<vmem>>, vector<32x64xf32>
    %7 = arith.truncf %6 : vector<32x64xf32> to vector<32x64xbf16>
    %cst = arith.constant dense<0.000000e+00> : vector<16x64xf32>
    %8 = tpu.matmul %5, %7, %cst {dimension_numbers = #tpu.dot_dimension_numbers<[1], [0], [0], [1], [0, 0, 1, 1], [], []>} : vector<16x32xbf16>, vector<32x64xbf16>, vector<16x64xf32> -> vector<16x64xf32>
    %9 = arith.addf %3, %8 : vector<16x64xf32>
    %c0_6 = arith.constant 0 : index
    %c0_7 = arith.constant 0 : index
    %10 = vector.load %arg7[%c0_6, %c0_7] : memref<16x64xf32, #tpu.memory_space<vmem>>, vector<16x64xf32>
    tpu.vector_store %arg7[%c0_6, %c0_7], %9 {strides = array<i32>} : memref<16x64xf32, #tpu.memory_space<vmem>>, vector<16x64xf32>,
    %c0_i32_8 = arith.constant 0 : i32
    %11 = arith.cmpi eq, %arg2, %c0_i32_8 : i32
    %12 = arith.extui %11 : i1 to i32
    %c0_i32_9 = arith.constant 0 : i32
    %13 = arith.cmpi ne, %12, %c0_i32_9 : i32
    scf.if %13 {
      %c0_10 = arith.constant 0 : index
      %c0_11 = arith.constant 0 : index
      %14 = vector.load %arg7[%c0_10, %c0_11] : memref<16x64xf32, #tpu.memory_space<vmem>>, vector<16x64xf32>
      %c0_12 = arith.constant 0 : index
      %c0_13 = arith.constant 0 : index
      %15 = vector.load %arg5[%c0_12, %c0_13] : memref<1x64xf32, #tpu.memory_space<vmem>>, vector<1x64xf32>
      %16 = vector.broadcast %15 : vector<1x64xf32> to vector<16x64xf32>
      %17 = arith.addf %14, %16 : vector<16x64xf32>
      %c0_14 = arith.constant 0 : index
      %c0_15 = arith.constant 0 : index
      %18 = vector.load %arg6[%c0_14, %c0_15] : memref<16x64xf32, #tpu.memory_space<vmem>>, vector<16x64xf32>
      tpu.vector_store %arg6[%c0_14, %c0_15], %17 {strides = array<i32>} : memref<16x64xf32, #tpu.memory_space<vmem>>, vector<16x64xf32>,
    } else {
    }
    return
  }
  func.func @transform_0(%arg0: i32, %arg1: i32, %arg2: i32) -> (i32, i32) {
    %c0_i32 = arith.constant 0 : i32
    return %arg0, %arg2 : i32, i32
  }
  func.func @transform_1(%arg0: i32, %arg1: i32, %arg2: i32) -> (i32, i32) {
    %c0_i32 = arith.constant 0 : i32
    return %arg2, %arg1 : i32, i32
  }
  func.func @transform_2(%arg0: i32, %arg1: i32, %arg2: i32) -> (i32, i32) {
    %c0_i32 = arith.constant 0 : i32
    %c0_i32_0 = arith.constant 0 : i32
    return %c0_i32, %arg1 : i32, i32
  }
  func.func @transform_3(%arg0: i32, %arg1: i32, %arg2: i32) -> (i32, i32) {
    %c0_i32 = arith.constant 0 : i32
    return %arg0, %arg1 : i32, i32
  }
}

</mosaic_0001>

<llo_original>
// kernel: tpu_custom_call.1
$region0: #{tpu_custom_call.1}
  #allocation0 [shape = 'u32[]', space=smem, size = 0x4, offset = 0x4, fixed_abs, tag = 'smem constant byte address 0x4 - core index']
  #allocation1 [shape = 'u32[144,128]{1,0:T(1,128)}', space=vmem, size = 0x12000, scoped, tag = 'internal scratch']
  #allocation2 [shape = 'f32[16,64]{1,0:T(8,128)}', space=vmem, size = 0x2000, scoped, tag = 'scratch operand']
  %s0 = inlined_call_operand.hbm [shape: f32[16,32], index: 0, kind: input, shape index: {}]
  %s1 = inlined_call_operand.hbm [shape: f32[32,64], index: 1, kind: input, shape index: {}]
  %s2 = inlined_call_operand.vmem [shape: f32[1,64], index: 2, kind: input, shape index: {}]
  %s3 = inlined_call_operand.hbm [shape: f32[16,64], index: 3, kind: output, shape index: {}]
  %s4 = sld [smem:[#allocation0]]
  $region38: #{tpu_custom_call.1} parent=0
    _
  %s6 = ssub.s32 1, %s4
  %s7 = scalar_select 0, %s6, %s4
  $region1: #{tpu_custom_call.1} parent=0
    #allocation3 [shape = 'u8[8192]{0}', space=vmem, size = 0x2000, scoped, tag = 'input window, operand 0, single buffered']
    #allocation4 [shape = 's32[1]{0}', space=sflag, size = 0x4, scoped, tag = 'scoped memory for tpu_custom_call.1']
    #allocation5 [shape = 's32[1]{0}', space=sflag, size = 0x4, scoped, tag = 'scoped memory for tpu_custom_call.1']
    #allocation6 [shape = 'u8[16384]{0}', space=vmem, size = 0x4000, scoped, tag = 'input window, operand 1, single buffered']
    #allocation7 [shape = 's32[1]{0}', space=sflag, size = 0x4, scoped, tag = 'scoped memory for tpu_custom_call.1']
    #allocation8 [shape = 'u8[8192]{0}', space=vmem, size = 0x2000, scoped, tag = 'output window, operand 0, single buffered']
    %8 = vsyncpa [#allocation4], 0
    %9 = vsyncpa [#allocation7], 0
    %10 = vsyncpa [#allocation5], 0
    // Predicated region
    $region2: #{tpu_custom_call.1} parent=1 // pred_check
      _
    $region3: #{tpu_custom_call.1} parent=1 // pred_check_branch
      %12 = sbr.rel (0) target = $region5
    $region4: #{tpu_custom_call.1} parent=1 // pred_region
      %s14 = ssub.s32 256, 256
      %15 = vsyncadd [#allocation4], %s14
      %s16 = sshll.u32 [#allocation3], 4
      %s17 = int_to_ptr.vmem [resolvable:$true] %s16
      %22 = dma.hbm_to_vmem [thread:$0]  %s0, 256, %s17, [#allocation4], 128, 128, 8
    $region5: #{tpu_custom_call.1} parent=1 // pred_fallthru
      _
    // Predicated region
    $region6: #{tpu_custom_call.1} parent=1 // pred_check
      _
    $region7: #{tpu_custom_call.1} parent=1 // pred_check_branch
      %24 = sbr.rel (0) target = $region9
    $region8: #{tpu_custom_call.1} parent=1 // pred_region
      %s26 = ssub.s32 512, 512
      %27 = vsyncadd [#allocation7], %s26
      %s28 = sshll.u32 [#allocation6], 4
      %s29 = int_to_ptr.vmem [resolvable:$true] %s28
      %34 = dma.hbm_to_vmem [thread:$0]  %s1, 512, %s29, [#allocation7], 128, 128, 8
    $region9: #{tpu_custom_call.1} parent=1 // pred_fallthru
      _
    // Predicated region
    $region10: #{tpu_custom_call.1} parent=1 // pred_check
      _
    $region11: #{tpu_custom_call.1} parent=1 // pred_check_branch
      %36 = sbr.rel (0) target = $region13
    $region12: #{tpu_custom_call.1} parent=1 // pred_region
      _
    $region13: #{tpu_custom_call.1} parent=1 // pred_fallthru
      _
    // Predicated region
    $region14: #{tpu_custom_call.1} parent=1 // pred_check
      _
    $region15: #{tpu_custom_call.1} parent=1 // pred_check_branch
      %38 = sbr.rel (0) target = $region17
    $region16: #{tpu_custom_call.1} parent=1 // pred_region
      %39 = dma.done [#allocation4], 256
    $region17: #{tpu_custom_call.1} parent=1 // pred_fallthru
      _
    // Predicated region
    $region18: #{tpu_custom_call.1} parent=1 // pred_check
      _
    $region19: #{tpu_custom_call.1} parent=1 // pred_check_branch
      %41 = sbr.rel (0) target = $region21
    $region20: #{tpu_custom_call.1} parent=1 // pred_region
      %42 = dma.done [#allocation7], 512
    $region21: #{tpu_custom_call.1} parent=1 // pred_fallthru
      _
    %p44 = scmp.eq.s32.totalorder 0, 0
    // Predicated region
    $region22: #{tpu_custom_call.1} parent=1 // pred_check
      %p45 = pneg %p44
    $region23: #{tpu_custom_call.1} parent=1 // pred_check_branch
      %47 = sbr.rel (%p45) target = $region25
    $region24: #{tpu_custom_call.1} parent=1 // pred_region
      %vm48 = vcmask 523264
      %49 = vst.msk [vmem:[#allocation2] sm:$0xff] %vm48, 0.0
      %50 = vst.msk [vmem:[#allocation2 + $0x8] sm:$0xff] %vm48, 0.0
    $region25: #{tpu_custom_call.1} parent=1 // pred_fallthru
      _
    %v51 = vld [vmem:[#allocation2] sm:$0xff]
    %v52 = vld [vmem:[#allocation2 + $0x8] sm:$0xff]
    %v53 = vld [vmem:[#allocation3] sm:$0xff]
    %v54 = vld [vmem:[#allocation3 + $0x8] sm:$0xff]
    %v55 = vpack.c.bf16 %v54, %v53
    %v56 = vld [vmem:[#allocation6] sm:$0xff]
    %v57 = vld [vmem:[#allocation6 + $0x8] sm:$0xff]
    %v58 = vld [vmem:[#allocation6 + $0x10] sm:$0xff]
    %v59 = vld [vmem:[#allocation6 + $0x18] sm:$0xff]
    %v60 = vpack.c.bf16 %v57, %v56
    %v61 = vpack.c.bf16 %v59, %v58
    %vm62 = vcmask 261120
    %v64 = vsel %vm62, %v55, 0
    %66 = vmatprep.subr.bf16.mxu0 0
    %67 = vmatpush1.bf16.msra.mxu0 %v60
    %68 = vmatprep.subr.bf16.mxu0 0
    %69 = vmatpush1.bf16.msra.mxu0 %v61
    %70 = vmatprep.subr.bf16.mxu0 0
    %71 = vmatpush1.bf16.msra.mxu0 0
    %72 = vmatprep.subr.bf16.mxu0 0
    %73 = vmatpush1.bf16.msra.mxu0 0
    %74 = vmatprep.subr.bf16.mxu0 0
    %75 = vmatpush1.bf16.msra.mxu0 0
    %76 = vmatprep.subr.bf16.mxu0 0
    %77 = vmatpush1.bf16.msra.mxu0 0
    %78 = vmatprep.subr.bf16.mxu0 0
    %79 = vmatpush1.bf16.msra.mxu0 0
    %80 = vmatprep.subr.bf16.mxu0 0
    %81 = vmatpush1.bf16.msra.mxu0 0
    %82 = vmatprep.subr.bf16.mxu0 0
    %83 = vmatpush1.bf16.msra.mxu0 0
    %84 = vmatprep.subr.bf16.mxu0 0
    %85 = vmatpush1.bf16.msra.mxu0 0
    %86 = vmatprep.subr.bf16.mxu0 0
    %87 = vmatpush1.bf16.msra.mxu0 0
    %88 = vmatprep.subr.bf16.mxu0 0
    %89 = vmatpush1.bf16.msra.mxu0 0
    %90 = vmatprep.subr.bf16.mxu0 0
    %91 = vmatpush1.bf16.msra.mxu0 0
    %92 = vmatprep.subr.bf16.mxu0 0
    %93 = vmatpush1.bf16.msra.mxu0 0
    %94 = vmatprep.subr.bf16.mxu0 0
    %95 = vmatpush1.bf16.msra.mxu0 0
    %96 = vmatprep.subr.bf16.mxu0 0
    %97 = vmatpush1.bf16.msra.mxu0 0
    %98 = vmatprep.mubr.bf16.mxu0 0
    %99 = vmatmul.mubr.bf16.gmra.mrb[0].mxu0 %v64
    %v100 = vpop.f32.mrb[0].mxu0
    %v101 = vadd.f32 0.0, %v100
    %v102 = vpop.f32.mrb[0].mxu0
    %v103 = vpop.f32.mrb[0].mxu0
    %v104 = vadd.f32 0.0, %v103
    %v105 = vpop.f32.mrb[0].mxu0
    %106 = vdwg.mxu0
    %v107 = vadd.f32 %v51, %v101
    %v108 = vadd.f32 %v52, %v104
    %vm109 = vcmask 523264
    %110 = vst.msk [vmem:[#allocation2] sm:$0xff] %vm109, %v107
    %111 = vst.msk [vmem:[#allocation2 + $0x8] sm:$0xff] %vm109, %v108
    // Predicated region
    $region26: #{tpu_custom_call.1} parent=1 // pred_check
      %p112 = pneg %p44
    $region27: #{tpu_custom_call.1} parent=1 // pred_check_branch
      %114 = sbr.rel (%p112) target = $region29
    $region28: #{tpu_custom_call.1} parent=1 // pred_region
      %v115 = vld [vmem:[#allocation2] sm:$0xff]
      %v116 = vld [vmem:[#allocation2 + $0x8] sm:$0xff]
      %v117 = vld [vmem:[%s2] sm:$0x1]
      %v119 = vlaneseq
      %v120 = vshrl.u32 %v119, 7
      %v121 = vsub.s32 0, %v120
      %v122 = vrot.slane %v117, %v121
      %v124 = vadd.f32 %v115, %v122
      %v125 = vadd.f32 %v116, %v122
      %126 = vst.msk [vmem:[#allocation8] sm:$0xff] %vm109, %v124
      %127 = vst.msk [vmem:[#allocation8 + $0x8] sm:$0xff] %vm109, %v125
    $region29: #{tpu_custom_call.1} parent=1 // pred_fallthru
      _
    // Predicated region
    $region30: #{tpu_custom_call.1} parent=1 // pred_check
      _
    $region31: #{tpu_custom_call.1} parent=1 // pred_check_branch
      %129 = sbr.rel (0) target = $region33
    $region32: #{tpu_custom_call.1} parent=1 // pred_region
      %s131 = ssub.s32 256, 256
      %132 = vsyncadd [#allocation5], %s131
      %s133 = sshll.u32 [#allocation8], 4
      %s134 = int_to_ptr.vmem [resolvable:$true] %s133
      %139 = dma.vmem_to_hbm [thread:$0]  %s134, 256, %s3, [#allocation5], 128, 128, 8
    $region33: #{tpu_custom_call.1} parent=1 // pred_fallthru
      _
    // Predicated region
    $region34: #{tpu_custom_call.1} parent=1 // pred_check
      _
    $region35: #{tpu_custom_call.1} parent=1 // pred_check_branch
      %141 = sbr.rel (0) target = $region37
    $region36: #{tpu_custom_call.1} parent=1 // pred_region
      %142 = dma.done [#allocation5], 256
    $region37: #{tpu_custom_call.1} parent=1 // pred_fallthru
      _
    %143 = vsyncpa [#allocation4], 1
    %144 = vsyncpa [#allocation7], 1
    %145 = vsyncpa [#allocation5], 1

</llo_original>
